<compile_context>
chip_gen: v5e
topology: v5e:2x2
jax: 0.10.0
libtpu: 0.0.40
codegen_flags: <defaults>
</compile_context>

<pallas_src>
import jax
import jax.numpy as jnp
from jax import lax
from jax.experimental import pallas as pl
from jax.experimental.pallas import tpu as pltpu

_ITEMSIZE = 4  # float32


def _linear_kernel(x_ref, w_ref, o_ref):
    # x_ref: (TB, D), w_ref: (1, D), o_ref: (1, TB)
    # Contract w's D against x's D -> lane-dense (1, TB) result (batch on the
    # lane axis -> unmasked vst), f32 accumulation on the MXU.
    o_ref[...] = lax.dot_general(
        w_ref[...],
        x_ref[...],
        dimension_numbers=(((1,), (1,)), ((), ())),
        preferred_element_type=jnp.float32,
    )


def _make_k_tiled_kernel(D, TK):
    """Kernel for the wide-D fallback: grid=(batch_tiles, k_tiles)."""
    mask_needed = (D % TK) != 0

    def kernel(x_ref, w_ref, o_ref):
        k = pl.program_id(1)

        @pl.when(k == 0)
        def _():
            o_ref[...] = jnp.zeros_like(o_ref)

        w_blk = w_ref[...]
        x_blk = x_ref[...]
        if mask_needed:
            # Ragged last K block: zero out-of-range columns so OOB garbage
            # (potentially NaN/Inf) never reaches the accumulator.
            col = lax.broadcasted_iota(jnp.int32, (1, TK), 1)
            valid = (k * TK + col) < D
            w_blk = jnp.where(valid, w_blk, 0.0)
            x_blk = jnp.where(valid, x_blk, 0.0)

        o_ref[...] += lax.dot_general(
            w_blk,
            x_blk,
            dimension_numbers=(((1,), (1,)), ((), ())),
            preferred_element_type=jnp.float32,
        )

    return kernel


def linear_forward(x, w, *, payload_bytes=4 << 20, x_vmem_budget_bytes=12 << 20):
    """Pallas forward pass for LinearModel: y = x @ w.T (no bias).

    x: (batch, input_size) float32
    w: (1, input_size)     float32
    returns: (batch, 1)    float32
    """
    B, D = x.shape
    assert w.shape == (1, D)

    cost = pl.CostEstimate(
        flops=2 * B * D,
        transcendentals=0,
        bytes_accessed=_ITEMSIZE * (B * D + D + B),
    )

    # Rows per full-D tile allowed by the DMA-payload target and the
    # double-buffered x VMEM budget.
    tb = min(payload_bytes // (_ITEMSIZE * D),
             x_vmem_budget_bytes // (2 * _ITEMSIZE * D))
    tb = (tb // 128) * 128

    if tb >= 128:
        # ---------------- Full-D path: grid over batch only. ----------------
        if B <= tb:
            TB = B  # single block == full array shape (divisibility waived)
        else:
            # Keep the grid >= 2 and roughly balanced so the "parallel" batch
            # axis can be sharded across both v7x TensorCores.
            half = pl.cdiv(pl.cdiv(B, 2), 128) * 128
            TB = max(128, min(tb, half))
        grid = (pl.cdiv(B, TB),)

        out_row = pl.pallas_call(
            _linear_kernel,
            out_shape=jax.ShapeDtypeStruct((1, B), jnp.float32),
            grid=grid,
            in_specs=[
                pl.BlockSpec((TB, D), lambda i: (i, 0)),  # x: batch-tiled, pipelined
                pl.BlockSpec((1, D), lambda i: (0, 0)),   # w: resident, fetched once
            ],
            out_specs=pl.BlockSpec((1, TB), lambda i: (0, i)),  # lane-dense output
            compiler_params=pltpu.CompilerParams(
                dimension_semantics=("parallel",),
            ),
            cost_estimate=cost,
        )(x, w)
    else:
        # ----------- K-tiled fallback for very wide input_size. -------------
        TB = B if B <= 512 else 512
        tk = min(payload_bytes // (_ITEMSIZE * TB),
                 x_vmem_budget_bytes // (2 * _ITEMSIZE * TB))
        TK = max(128, (tk // 128) * 128)
        TK = min(TK, pl.cdiv(D, 128) * 128)
        grid = (pl.cdiv(B, TB), pl.cdiv(D, TK))  # reduction axis last

        out_row = pl.pallas_call(
            _make_k_tiled_kernel(D, TK),
            out_shape=jax.ShapeDtypeStruct((1, B), jnp.float32),
            grid=grid,
            in_specs=[
                pl.BlockSpec((TB, TK), lambda i, k: (i, k)),
                pl.BlockSpec((1, TK), lambda i, k: (0, k)),
            ],
            out_specs=pl.BlockSpec((1, TB), lambda i, k: (0, i)),
            compiler_params=pltpu.CompilerParams(
                dimension_semantics=("parallel", "arbitrary"),
            ),
            cost_estimate=cost,
        )(x, w)

    # Back to the PyTorch (batch, 1) layout.  The [:B] slice discards any
    # ragged-tile garbage lanes -- it is load-bearing, keep it coupled to the
    # unpadded (ragged last block) tiling above.
    return out_row[0, :B].reshape(B, 1)


if __name__ == "__main__":
    key = jax.random.PRNGKey(0)
    kx, kw, kx2, kx3, kw3 = jax.random.split(key, 5)

    # --- Small shapes matching the module demo (standardized features). ---
    batch, input_size = 8, 32
    x = jax.random.normal(kx, (batch, input_size), dtype=jnp.float32)
    # nn.Linear default init: uniform(-1/sqrt(in), 1/sqrt(in)), shape (1, in).
    bound = 1.0 / (input_size ** 0.5)
    w = jax.random.uniform(kw, (1, input_size), dtype=jnp.float32,
                           minval=-bound, maxval=bound)

    y = linear_forward(x, w)
    jax.block_until_ready(y)
    assert y.shape == (batch, 1)
    assert jnp.allclose(y, x @ w.T, atol=1e-5), "mismatch (small batch)"

    # --- Batch-tiled path: grid >= 2, ragged last block, no wrapper pad. ---
    big_batch = 40000
    x_big = jax.random.normal(kx2, (big_batch, input_size), dtype=jnp.float32)
    y_big = linear_forward(x_big, w)
    jax.block_until_ready(y_big)
    assert y_big.shape == (big_batch, 1)
    assert jnp.allclose(y_big, x_big @ w.T, atol=1e-5), "mismatch (tiled batch)"

    # --- K-tiled fallback (forced via tiny budgets), ragged K block mask. ---
    b3, d3 = 300, 400
    x3 = jax.random.normal(kx3, (b3, d3), dtype=jnp.float32)
    bound3 = 1.0 / (d3 ** 0.5)
    w3 = jax.random.uniform(kw3, (1, d3), dtype=jnp.float32,
                            minval=-bound3, maxval=bound3)
    y3 = linear_forward(x3, w3, payload_bytes=64 << 10,
                        x_vmem_budget_bytes=128 << 10)
    jax.block_until_ready(y3)
    assert y3.shape == (b3, 1)
    assert jnp.allclose(y3, x3 @ w3.T, atol=1e-4, rtol=1e-4), "mismatch (K-tiled)"

    print("KERNEL_OK")
</pallas_src>

<mosaic_0001>
module attributes {stable_mosaic.version = 11 : i64} {
  func.func @_linear_kernel(%arg0: i32, %arg1: memref<8x32xf32, #tpu.memory_space<vmem>>, %arg2: memref<1x32xf32, #tpu.memory_space<vmem>>, %arg3: memref<1x8xf32, #tpu.memory_space<vmem>>) attributes {dimension_semantics = [#tpu.dimension_semantics<parallel>], iteration_bounds = array<i64: 1>, scalar_prefetch = 0 : i64, scratch_operands = 0 : i64, tpu.core_type = #tpu.core_type<tc>, window_params = [{transform_indices = @transform_0, window_bounds = array<i64: 8, 32>}, {pipeline_mode = #tpu.pipeline_mode<synchronous>, transform_indices = @transform_1, window_bounds = array<i64: 1, 32>}, {transform_indices = @transform_2, window_bounds = array<i64: 1, 8>}]} {
    %c0 = arith.constant 0 : index
    %c0_0 = arith.constant 0 : index
    %0 = vector.load %arg2[%c0, %c0_0] : memref<1x32xf32, #tpu.memory_space<vmem>>, vector<1x32xf32>
    %c0_1 = arith.constant 0 : index
    %c0_2 = arith.constant 0 : index
    %1 = vector.load %arg1[%c0_1, %c0_2] : memref<8x32xf32, #tpu.memory_space<vmem>>, vector<8x32xf32>
    %cst = arith.constant dense<0.000000e+00> : vector<1x8xf32>
    %2 = tpu.matmul %0, %1, %cst {dimension_numbers = #tpu.dot_dimension_numbers<[1], [1], [0], [0], [0, 0, 1, 0], [], []>} : vector<1x32xf32>, vector<8x32xf32>, vector<1x8xf32> -> vector<1x8xf32>
    %c0_3 = arith.constant 0 : index
    %c0_4 = arith.constant 0 : index
    %3 = vector.load %arg3[%c0_3, %c0_4] : memref<1x8xf32, #tpu.memory_space<vmem>>, vector<1x8xf32>
    tpu.vector_store %arg3[%c0_3, %c0_4], %2 {strides = array<i32>} : memref<1x8xf32, #tpu.memory_space<vmem>>, vector<1x8xf32>,
    return
  }
  func.func @transform_0(%arg0: i32) -> (i32, i32) {
    %c0_i32 = arith.constant 0 : i32
    %c0_i32_0 = arith.constant 0 : i32
    return %arg0, %c0_i32 : i32, i32
  }
  func.func @transform_1(%arg0: i32) -> (i32, i32) {
    %c0_i32 = arith.constant 0 : i32
    %c0_i32_0 = arith.constant 0 : i32
    %c0_i32_1 = arith.constant 0 : i32
    return %c0_i32, %c0_i32_0 : i32, i32
  }
  func.func @transform_2(%arg0: i32) -> (i32, i32) {
    %c0_i32 = arith.constant 0 : i32
    %c0_i32_0 = arith.constant 0 : i32
    return %c0_i32, %arg0 : i32, i32
  }
}

</mosaic_0001>

<llo_original>
// kernel: tpu_custom_call.1
$region0: #{tpu_custom_call.1}
  #allocation0 [shape = 'u32[]', space=smem, size = 0x4, offset = 0x4, fixed_abs, tag = 'smem constant byte address 0x4 - core index']
  #allocation1 [shape = 'u32[72,128]{1,0:T(1,128)}', space=vmem, size = 0x9000, scoped, tag = 'internal scratch']
  %s0 = inlined_call_operand.hbm [shape: f32[8,32], index: 0, kind: input, shape index: {}]
  %s1 = inlined_call_operand.hbm [shape: f32[1,32], index: 1, kind: input, shape index: {}]
  %s2 = inlined_call_operand.hbm [shape: f32[1,8], index: 2, kind: output, shape index: {}]
  %s3 = sld [smem:[#allocation0]]
  $region26: #{tpu_custom_call.1} parent=0
    _
  %s5 = ssub.s32 1, %s3
  %s6 = scalar_select 0, %s5, %s3
  $region1: #{tpu_custom_call.1} parent=0
    #allocation2 [shape = 'u8[4096]{0}', space=vmem, size = 0x1000, scoped, tag = 'input window, operand 0, single buffered']
    #allocation3 [shape = 's32[1]{0}', space=sflag, size = 0x4, scoped, tag = 'scoped memory for tpu_custom_call.1']
    #allocation4 [shape = 's32[1]{0}', space=sflag, size = 0x4, scoped, tag = 'scoped memory for tpu_custom_call.1']
    #allocation5 [shape = 'u8[512]{0}', space=vmem, size = 0x400, scoped, tag = 'input window, operand 1, single buffered']
    #allocation6 [shape = 's32[1]{0}', space=sflag, size = 0x4, scoped, tag = 'scoped memory for tpu_custom_call.1']
    #allocation7 [shape = 'u8[512]{0}', space=vmem, size = 0x400, scoped, tag = 'output window, operand 0, single buffered']
    %7 = vsyncpa [#allocation3], 0
    %8 = vsyncpa [#allocation6], 0
    %9 = vsyncpa [#allocation4], 0
    // Predicated region
    $region2: #{tpu_custom_call.1} parent=1 // pred_check
      _
    $region3: #{tpu_custom_call.1} parent=1 // pred_check_branch
      %11 = sbr.rel (0) target = $region5
    $region4: #{tpu_custom_call.1} parent=1 // pred_region
      %13 = vsyncadd [#allocation3], 0
      %s15 = sshll.u32 %s0, 4
      %s16 = int_to_ptr.hbm [resolvable:$true] %s15
      %s17 = sshll.u32 [#allocation2], 4
      %s18 = int_to_ptr.vmem [resolvable:$true] %s17
      %20 = dma.hbm_to_vmem [thread:$0]  %s16, 128, %s18, [#allocation3]
    $region5: #{tpu_custom_call.1} parent=1 // pred_fallthru
      _
    // Predicated region
    $region6: #{tpu_custom_call.1} parent=1 // pred_check
      _
    $region7: #{tpu_custom_call.1} parent=1 // pred_check_branch
      %22 = sbr.rel (0) target = $region9
    $region8: #{tpu_custom_call.1} parent=1 // pred_region
      %24 = vsyncadd [#allocation6], 0
      %s26 = sshll.u32 %s1, 4
      %s27 = int_to_ptr.hbm [resolvable:$true] %s26
      %s28 = sshll.u32 [#allocation5], 4
      %s29 = int_to_ptr.vmem [resolvable:$true] %s28
      %31 = dma.hbm_to_vmem [thread:$0]  %s27, 16, %s29, [#allocation6]
    $region9: #{tpu_custom_call.1} parent=1 // pred_fallthru
      _
    // Predicated region
    $region10: #{tpu_custom_call.1} parent=1 // pred_check
      _
    $region11: #{tpu_custom_call.1} parent=1 // pred_check_branch
      %33 = sbr.rel (0) target = $region13
    $region12: #{tpu_custom_call.1} parent=1 // pred_region
      %35 = dma.done [#allocation3], 128
    $region13: #{tpu_custom_call.1} parent=1 // pred_fallthru
      _
    // Predicated region
    $region14: #{tpu_custom_call.1} parent=1 // pred_check
      _
    $region15: #{tpu_custom_call.1} parent=1 // pred_check_branch
      %37 = sbr.rel (0) target = $region17
    $region16: #{tpu_custom_call.1} parent=1 // pred_region
      %39 = dma.done [#allocation6], 16
    $region17: #{tpu_custom_call.1} parent=1 // pred_fallthru
      _
    %v40 = vld [vmem:[#allocation5] sm:$0x1]
    %v41 = vld [vmem:[#allocation2] sm:$0xff]
    %vm42 = vcmask 261120
    %v44 = vsel %vm42, %v40, 0
    %v47 = vsel %vm42, %v41, 0
    %49 = vmatpush.xpose.msra.mxu0 0.0
    %50 = vmatpush.xpose.msra.mxu0 0.0
    %51 = vmatpush.xpose.msra.mxu0 0.0
    %52 = vmatpush.xpose.msra.mxu0 0.0
    %53 = vmatpush.xpose.msra.mxu0 0.0
    %54 = vmatpush.xpose.msra.mxu0 0.0
    %55 = vmatpush.xpose.msra.mxu0 0.0
    %56 = vmatpush.xpose.msra.mxu0 0.0
    %57 = vmatpush.xpose.msra.mxu0 0.0
    %58 = vmatpush.xpose.msra.mxu0 0.0
    %59 = vmatpush.xpose.msra.mxu0 0.0
    %60 = vmatpush.xpose.msra.mxu0 0.0
    %61 = vmatpush.xpose.msra.mxu0 0.0
    %62 = vmatpush.xpose.msra.mxu0 0.0
    %63 = vmatpush.xpose.msra.mxu0 0.0
    %64 = vmatpush.xpose.msra.mxu0 %v47
    %65 = vmatmul.f32.gmra.mxu0 %v44
    %v66 = vpop.f32.mrf.mxu0
    %v67 = vadd.f32 0.0, %v66
    %68 = vdwg.mxu0
    %vm69 = vcmask 57344
    %70 = vst.msk [vmem:[#allocation7] sm:$0x1] %vm69, %v67
    // Predicated region
    $region18: #{tpu_custom_call.1} parent=1 // pred_check
      _
    $region19: #{tpu_custom_call.1} parent=1 // pred_check_branch
      %72 = sbr.rel (0) target = $region21
    $region20: #{tpu_custom_call.1} parent=1 // pred_region
      %74 = vsyncadd [#allocation4], 0
      %s76 = sshll.u32 [#allocation7], 4
      %s77 = int_to_ptr.vmem [resolvable:$true] %s76
      %s78 = sshll.u32 %s2, 4
      %s79 = int_to_ptr.hbm [resolvable:$true] %s78
      %81 = dma.vmem_to_hbm [thread:$0]  %s77, 16, %s79, [#allocation4]
    $region21: #{tpu_custom_call.1} parent=1 // pred_fallthru
      _
    // Predicated region
    $region22: #{tpu_custom_call.1} parent=1 // pred_check
      _
    $region23: #{tpu_custom_call.1} parent=1 // pred_check_branch
      %83 = sbr.rel (0) target = $region25
    $region24: #{tpu_custom_call.1} parent=1 // pred_region
      %85 = dma.done [#allocation4], 16
    $region25: #{tpu_custom_call.1} parent=1 // pred_fallthru
      _
    %86 = vsyncpa [#allocation3], 1
    %87 = vsyncpa [#allocation6], 1
    %88 = vsyncpa [#allocation4], 1

</llo_original>
